<compile_context>
chip_gen: v7x
topology: tpu7x:2x2x1
jax: 0.10.0
libtpu: 0.0.40
codegen_flags: <defaults>
</compile_context>

<pallas_src>
import functools

import jax
import jax.numpy as jnp
from jax.experimental import pallas as pl
from jax.experimental.pallas import tpu as pltpu


def _kd_partial_kernel(student_ref, teacher_ref, slabel_ref, out_ref, *,
                       label_smoothing: float, batch: int):
    """Per-tile partial sums: MSE sum over the tile, smoothed-CE sum over rows."""
    i = pl.program_id(0)
    s = student_ref[...].astype(jnp.float32)      # [TB, C] student logits
    t = teacher_ref[...].astype(jnp.float32)      # [TB, C] teacher logits
    s_label = slabel_ref[...].astype(jnp.float32)  # [TB, 1] student logit at label
    tb, c = s.shape

    # Row-validity mask for the ragged last tile (rows >= batch contribute 0).
    # Mask is applied only to the [TB,1] row results (not the full tiles):
    # jnp.where select does not propagate NaN/Inf from the unselected operand,
    # so garbage in padded rows cannot leak into the partial sums.
    row = jax.lax.broadcasted_iota(jnp.int32, (tb, 1), 0) + i * tb
    valid = row < batch                           # [TB, 1] bool

    # ---- MSE partial: lane-axis (class) row sums first, then tiny sublane sum.
    diff = s - t
    mse_rows = jnp.sum(diff * diff, axis=-1, keepdims=True)     # [TB, 1]
    mse_rows = jnp.where(valid, mse_rows, 0.0)
    mse_p = jnp.sum(mse_rows)                                   # scalar partial

    # ---- Label-smoothing CE partial (no [TB,C] smooth tensor, no in-kernel
    #      one-hot gather: label logit is streamed in as s_label).
    m = jnp.max(s, axis=-1, keepdims=True)                      # [TB, 1]
    z = s - m                                                   # [TB, C]
    lse = jnp.log(jnp.sum(jnp.exp(z), axis=-1, keepdims=True))  # [TB, 1]
    # sum_j log_prob_j = sum_j z_j - C * lse
    sum_lp = jnp.sum(z, axis=-1, keepdims=True) - jnp.float32(c) * lse   # [TB, 1]
    # log_prob at the label = (s_label - m) - lse
    lp_label = (s_label - m) - lse                              # [TB, 1]

    eps = jnp.float32(label_smoothing)
    off = eps / jnp.float32(c - 1)
    # ce_row = -sum(smooth * log_prob)
    #        = -[(1-eps) * lp_label + eps/(C-1) * (sum_lp - lp_label)]
    ce_rows = -((1.0 - eps) * lp_label + off * (sum_lp - lp_label))      # [TB, 1]
    ce_rows = jnp.where(valid, ce_rows, 0.0)
    ce_p = jnp.sum(ce_rows)                                     # scalar partial

    # ---- Lane-dense (8,128) partial-output tile: mse at (0,0), ce at (0,1).
    sub = jax.lax.broadcasted_iota(jnp.int32, (8, 128), 0)
    lane = jax.lax.broadcasted_iota(jnp.int32, (8, 128), 1)
    tile = jnp.where((sub == 0) & (lane == 0), mse_p,
                     jnp.where((sub == 0) & (lane == 1), ce_p, 0.0))
    out_ref[...] = tile[None]                                   # (1, 8, 128)


def _round_up(x, m):
    return ((x + m - 1) // m) * m


def _row_multiple(dtype):
    """Sublane-packing-aware row rounding: 8 for >=32-bit, 16 for 16-bit, 32 for 8-bit."""
    itemsize = jnp.dtype(dtype).itemsize
    if itemsize >= 4:
        return 8
    if itemsize == 2:
        return 16
    return 32


def kd_loss(student_scores, teacher_scores, labels, *,
            label_smoothing=0.1, w_distill=1.0, w_metric=0.1, tile_b=None):
    """Pallas TPU implementation of KDLoss(mse, label_smoothing_cross_entropy).

    Pass logits in their native dtype (e.g. bf16) — the kernel is HBM-bound on
    v5e/v6e, so not pre-casting to f32 roughly halves the input bytes; the f32
    upcast happens per-tile in VMEM.
    """
    b, c = student_scores.shape
    row_mult = _row_multiple(student_scores.dtype)

    # Label-logit gather hoisted out of the kernel (reads only B elements).
    s_label = jnp.take_along_axis(
        student_scores, labels.reshape(b, 1).astype(jnp.int32), axis=-1
    ).astype(jnp.float32)                                       # [B, 1]

    if tile_b is None:
        # ~2 MiB per input per pipeline buffer: 2 inputs x 2 buffers = 8 MiB of
        # streamed VMEM plus a few tile-sized f32 temporaries stays comfortably
        # under the 40 MiB scoped limit (and v7x's 64 MiB physical VMEM), while
        # each grid step still moves enough bytes to amortize the ~0.35 us
        # per-step overhead.
        itemsize = jnp.dtype(student_scores.dtype).itemsize
        byte_budget = 2 * 1024 * 1024
        rows_fit = max(row_mult, byte_budget // max(1, c * itemsize))
        tile_b = min(_round_up(b, row_mult), _round_up(rows_fit, row_mult))
        # v7x has 2 TensorCores: if everything fits in one tile but B allows a
        # split, use (at least) 2 tiles so the "parallel" grid axis can shard.
        if tile_b >= b and b > row_mult:
            tile_b = _round_up(pl.cdiv(b, 2), row_mult)
    tile_b = max(row_mult, (int(tile_b) // row_mult) * row_mult)
    nt = pl.cdiv(b, tile_b)

    kernel = functools.partial(
        _kd_partial_kernel,
        label_smoothing=float(label_smoothing),
        batch=int(b),
    )

    partials = pl.pallas_call(
        kernel,
        out_shape=jax.ShapeDtypeStruct((nt, 8, 128), jnp.float32),
        grid=(nt,),
        in_specs=[
            pl.BlockSpec((tile_b, c), lambda i: (i, 0)),   # student scores
            pl.BlockSpec((tile_b, c), lambda i: (i, 0)),   # teacher scores
            pl.BlockSpec((tile_b, 1), lambda i: (i, 0)),   # student logit at label
        ],
        out_specs=pl.BlockSpec((1, 8, 128), lambda i: (i, 0, 0)),
        compiler_params=pltpu.CompilerParams(
            # Independent per-tile partial sums -> no carried state -> the batch
            # axis can shard across both v7x TensorCores.
            dimension_semantics=("parallel",),
            vmem_limit_bytes=40 * 1024 * 1024,
        ),
    )(student_scores, teacher_scores, s_label)

    # Final tiny reduction (fused) + normalization + weighting in plain JAX.
    sums = jnp.sum(partials[:, 0, :2], axis=0)                  # [2] = [mse, ce]
    mse = sums[0] / jnp.float32(b * c)
    ce = sums[1] / jnp.float32(b)
    return (jnp.float32(w_distill) * mse + jnp.float32(w_metric) * ce)


def _kd_loss_ref(student, teacher, labels, *,
                 label_smoothing=0.1, w_distill=1.0, w_metric=0.1):
    b, c = student.shape
    s32 = student.astype(jnp.float32)
    t32 = teacher.astype(jnp.float32)
    mse = jnp.mean((s32 - t32) ** 2)
    log_probs = jax.nn.log_softmax(s32, axis=-1)
    one_hot = jax.nn.one_hot(labels, c, dtype=jnp.float32)
    smooth = one_hot * (1.0 - label_smoothing) + (1.0 - one_hot) * (
        label_smoothing / (c - 1))
    ce = jnp.mean(jnp.sum(-smooth * log_probs, axis=-1))
    return w_distill * mse + w_metric * ce


if __name__ == "__main__":
    key = jax.random.PRNGKey(0)

    # Case 1: small canonical shape, f32.
    B, C = 8, 128
    k_s, k_t, k_l, key = jax.random.split(key, 4)
    student_scores = jax.random.normal(k_s, (B, C), dtype=jnp.float32)
    teacher_scores = jax.random.normal(k_t, (B, C), dtype=jnp.float32)
    labels = jax.random.randint(k_l, (B,), 0, C, dtype=jnp.int32)

    loss = kd_loss(student_scores, teacher_scores, labels,
                   label_smoothing=0.1, w_distill=1.0, w_metric=0.1)
    loss = jax.block_until_ready(loss)
    ref = _kd_loss_ref(student_scores, teacher_scores, labels,
                       label_smoothing=0.1, w_distill=1.0, w_metric=0.1)
    assert jnp.allclose(loss, ref, rtol=1e-4, atol=1e-5), (loss, ref)

    # Case 2: ragged batch (B not a multiple of the tile), multi-tile grid,
    # non-128-multiple class count -> exercises masking + parallel partials.
    B2, C2 = 20, 96
    k_s, k_t, k_l, key = jax.random.split(key, 4)
    s2 = jax.random.normal(k_s, (B2, C2), dtype=jnp.float32)
    t2 = jax.random.normal(k_t, (B2, C2), dtype=jnp.float32)
    l2 = jax.random.randint(k_l, (B2,), 0, C2, dtype=jnp.int32)

    loss2 = kd_loss(s2, t2, l2, label_smoothing=0.1, w_distill=1.0,
                    w_metric=0.1, tile_b=8)           # forces 3 tiles (8+8+4)
    loss2 = jax.block_until_ready(loss2)
    ref2 = _kd_loss_ref(s2, t2, l2, label_smoothing=0.1, w_distill=1.0,
                        w_metric=0.1)
    assert jnp.allclose(loss2, ref2, rtol=1e-4, atol=1e-5), (loss2, ref2)

    # Case 3: bf16 logits passed natively (no pre-cast), auto tile heuristic
    # (16-row sublane rounding + nt>=2 split for the 2-TC path).
    B3, C3 = 40, 256
    k_s, k_t, k_l, key = jax.random.split(key, 4)
    s3 = jax.random.normal(k_s, (B3, C3), dtype=jnp.float32).astype(jnp.bfloat16)
    t3 = jax.random.normal(k_t, (B3, C3), dtype=jnp.float32).astype(jnp.bfloat16)
    l3 = jax.random.randint(k_l, (B3,), 0, C3, dtype=jnp.int32)

    loss3 = kd_loss(s3, t3, l3, label_smoothing=0.1, w_distill=1.0, w_metric=0.1)
    loss3 = jax.block_until_ready(loss3)
    ref3 = _kd_loss_ref(s3, t3, l3, label_smoothing=0.1, w_distill=1.0,
                        w_metric=0.1)
    assert jnp.allclose(loss3, ref3, rtol=1e-3, atol=1e-4), (loss3, ref3)

    print("KERNEL_OK")
</pallas_src>

<mosaic_0001>
module attributes {stable_mosaic.version = 11 : i64} {
  func.func @_kd_partial_kernel(%arg0: i32, %arg1: memref<8x128xf32, #tpu.memory_space<vmem>>, %arg2: memref<8x128xf32, #tpu.memory_space<vmem>>, %arg3: memref<8x1xf32, #tpu.memory_space<vmem>>, %arg4: memref<1x8x128xf32, #tpu.memory_space<vmem>>) attributes {dimension_semantics = [#tpu.dimension_semantics<parallel>], iteration_bounds = array<i64: 1>, scalar_prefetch = 0 : i64, scratch_operands = 0 : i64, tpu.core_type = #tpu.core_type<tc>, window_params = [{transform_indices = @transform_0, window_bounds = array<i64: 8, 128>}, {transform_indices = @transform_1, window_bounds = array<i64: 8, 128>}, {transform_indices = @transform_2, window_bounds = array<i64: 8, 1>}, {transform_indices = @transform_3, window_bounds = array<i64: 1, 8, 128>}]} {
    %c0 = arith.constant 0 : index
    %c0_0 = arith.constant 0 : index
    %0 = vector.load %arg1[%c0, %c0_0] : memref<8x128xf32, #tpu.memory_space<vmem>>, vector<8x128xf32>
    %c0_1 = arith.constant 0 : index
    %c0_2 = arith.constant 0 : index
    %1 = vector.load %arg2[%c0_1, %c0_2] : memref<8x128xf32, #tpu.memory_space<vmem>>, vector<8x128xf32>
    %c0_3 = arith.constant 0 : index
    %c0_4 = arith.constant 0 : index
    %2 = vector.load %arg3[%c0_3, %c0_4] : memref<8x1xf32, #tpu.memory_space<vmem>>, vector<8x1xf32>
    %3 = tpu.iota {dimensions = array<i32: 0>} : vector<8x1xi32>
    %c8_i32 = arith.constant 8 : i32
    %4 = arith.muli %arg0, %c8_i32 : i32
    %5 = vector.broadcast %4 : i32 to vector<8x1xi32>
    %6 = arith.addi %3, %5 : vector<8x1xi32>
    %c8_i32_5 = arith.constant 8 : i32
    %7 = vector.broadcast %c8_i32_5 : i32 to vector<8x1xi32>
    %8 = arith.cmpi slt, %6, %7 : vector<8x1xi32>
    %9 = arith.subf %0, %1 : vector<8x128xf32>
    %10 = arith.mulf %9, %9 : vector<8x128xf32>
    %cst = arith.constant dense<0.000000e+00> : vector<8xf32>
    %11 = vector.multi_reduction <add>, %10, %cst [1] : vector<8x128xf32> to vector<8xf32>
    %12 = vector.shape_cast %11 : vector<8xf32> to vector<8x1xf32>
    %cst_6 = arith.constant 0.000000e+00 : f32
    %13 = vector.broadcast %cst_6 : f32 to vector<8x1xf32>
    %14 = arith.select %8, %12, %13 : vector<8x1xi1>, vector<8x1xf32>
    %15 = vector.shape_cast %14 : vector<8x1xf32> to vector<1x8x1xf32>
    %cst_7 = arith.constant dense<0.000000e+00> : vector<1xf32>
    %16 = vector.multi_reduction <add>, %15, %cst_7 [1, 2] : vector<1x8x1xf32> to vector<1xf32>
    %17 = vector.shape_cast %16 : vector<1xf32> to vector<1x1x1xf32>
    %18 = vector.extract %17[0, 0, 0] : f32 from vector<1x1x1xf32>
    %cst_8 = arith.constant dense<0xFF800000> : vector<8xf32>
    %19 = vector.multi_reduction <maximumf>, %0, %cst_8 [1] : vector<8x128xf32> to vector<8xf32>
    %20 = vector.shape_cast %19 : vector<8xf32> to vector<8x1xf32>
    %21 = vector.broadcast %20 : vector<8x1xf32> to vector<8x128xf32>
    %22 = arith.subf %0, %21 : vector<8x128xf32>
    %23 = math.exp %22 : vector<8x128xf32>
    %cst_9 = arith.constant dense<0.000000e+00> : vector<8xf32>
    %24 = vector.multi_reduction <add>, %23, %cst_9 [1] : vector<8x128xf32> to vector<8xf32>
    %25 = vector.shape_cast %24 : vector<8xf32> to vector<8x1xf32>
    %26 = math.log %25 : vector<8x1xf32>
    %cst_10 = arith.constant dense<0.000000e+00> : vector<8xf32>
    %27 = vector.multi_reduction <add>, %22, %cst_10 [1] : vector<8x128xf32> to vector<8xf32>
    %28 = vector.shape_cast %27 : vector<8xf32> to vector<8x1xf32>
    %cst_11 = arith.constant 1.280000e+02 : f32
    %29 = vector.broadcast %cst_11 : f32 to vector<8x1xf32>
    %30 = arith.mulf %29, %26 : vector<8x1xf32>
    %31 = arith.subf %28, %30 : vector<8x1xf32>
    %32 = arith.subf %2, %20 : vector<8x1xf32>
    %33 = arith.subf %32, %26 : vector<8x1xf32>
    %cst_12 = arith.constant 1.000000e-01 : f32
    %cst_13 = arith.constant 1.270000e+02 : f32
    %34 = arith.divf %cst_12, %cst_13 : f32
    %cst_14 = arith.constant 1.000000e+00 : f32
    %cst_15 = arith.constant 1.000000e-01 : f32
    %35 = arith.subf %cst_14, %cst_15 : f32
    %36 = vector.broadcast %35 : f32 to vector<8x1xf32>
    %37 = arith.mulf %36, %33 : vector<8x1xf32>
    %38 = arith.subf %31, %33 : vector<8x1xf32>
    %39 = vector.broadcast %34 : f32 to vector<8x1xf32>
    %40 = arith.mulf %39, %38 : vector<8x1xf32>
    %41 = arith.addf %37, %40 : vector<8x1xf32>
    %cst_16 = arith.constant 0.000000e+00 : f32
    %42 = vector.broadcast %cst_16 : f32 to vector<8x1xf32>
    %43 = arith.subf %42, %41 : vector<8x1xf32>
    %cst_17 = arith.constant 0.000000e+00 : f32
    %44 = vector.broadcast %cst_17 : f32 to vector<8x1xf32>
    %45 = arith.select %8, %43, %44 : vector<8x1xi1>, vector<8x1xf32>
    %46 = vector.shape_cast %45 : vector<8x1xf32> to vector<1x8x1xf32>
    %cst_18 = arith.constant dense<0.000000e+00> : vector<1xf32>
    %47 = vector.multi_reduction <add>, %46, %cst_18 [1, 2] : vector<1x8x1xf32> to vector<1xf32>
    %48 = vector.shape_cast %47 : vector<1xf32> to vector<1x1x1xf32>
    %49 = vector.extract %48[0, 0, 0] : f32 from vector<1x1x1xf32>
    %50 = tpu.iota {dimensions = array<i32: 0>} : vector<8x128xi32>
    %51 = tpu.iota {dimensions = array<i32: 1>} : vector<8x128xi32>
    %c0_i32 = arith.constant 0 : i32
    %52 = vector.broadcast %c0_i32 : i32 to vector<8x128xi32>
    %53 = arith.cmpi eq, %50, %52 : vector<8x128xi32>
    %c0_i32_19 = arith.constant 0 : i32
    %54 = vector.broadcast %c0_i32_19 : i32 to vector<8x128xi32>
    %55 = arith.cmpi eq, %51, %54 : vector<8x128xi32>
    %56 = arith.andi %53, %55 : vector<8x128xi1>
    %c0_i32_20 = arith.constant 0 : i32
    %57 = vector.broadcast %c0_i32_20 : i32 to vector<8x128xi32>
    %58 = arith.cmpi eq, %50, %57 : vector<8x128xi32>
    %c1_i32 = arith.constant 1 : i32
    %59 = vector.broadcast %c1_i32 : i32 to vector<8x128xi32>
    %60 = arith.cmpi eq, %51, %59 : vector<8x128xi32>
    %61 = arith.andi %58, %60 : vector<8x128xi1>
    %cst_21 = arith.constant 0.000000e+00 : f32
    %62 = vector.broadcast %49 : f32 to vector<8x128xf32>
    %63 = vector.broadcast %cst_21 : f32 to vector<8x128xf32>
    %64 = arith.select %61, %62, %63 : vector<8x128xi1>, vector<8x128xf32>
    %65 = vector.broadcast %18 : f32 to vector<8x128xf32>
    %66 = arith.select %56, %65, %64 : vector<8x128xi1>, vector<8x128xf32>
    %67 = vector.shape_cast %66 : vector<8x128xf32> to vector<1x8x128xf32>
    %c0_22 = arith.constant 0 : index
    %c0_23 = arith.constant 0 : index
    %c0_24 = arith.constant 0 : index
    %68 = vector.load %arg4[%c0_22, %c0_23, %c0_24] : memref<1x8x128xf32, #tpu.memory_space<vmem>>, vector<1x8x128xf32>
    tpu.vector_store %arg4[%c0_22, %c0_23, %c0_24], %67 {strides = array<i32>} : memref<1x8x128xf32, #tpu.memory_space<vmem>>, vector<1x8x128xf32>,
    return
  }
  func.func @transform_0(%arg0: i32) -> (i32, i32) {
    %c0_i32 = arith.constant 0 : i32
    %c0_i32_0 = arith.constant 0 : i32
    return %arg0, %c0_i32 : i32, i32
  }
  func.func @transform_1(%arg0: i32) -> (i32, i32) {
    %c0_i32 = arith.constant 0 : i32
    %c0_i32_0 = arith.constant 0 : i32
    return %arg0, %c0_i32 : i32, i32
  }
  func.func @transform_2(%arg0: i32) -> (i32, i32) {
    %c0_i32 = arith.constant 0 : i32
    %c0_i32_0 = arith.constant 0 : i32
    return %arg0, %c0_i32 : i32, i32
  }
  func.func @transform_3(%arg0: i32) -> (i32, i32, i32) {
    %c0_i32 = arith.constant 0 : i32
    %c0_i32_0 = arith.constant 0 : i32
    %c0_i32_1 = arith.constant 0 : i32
    return %arg0, %c0_i32, %c0_i32_0 : i32, i32, i32
  }
}

</mosaic_0001>

<llo_original>
// kernel: tpu_custom_call.1
$region0: #{tpu_custom_call.1}
  #allocation0 [shape = 'u32[]', space=smem, size = 0x4, offset = 0x4, fixed_abs, tag = 'smem constant byte address 0x4 - core index']
  #allocation1 [shape = 'u32[144,128]{1,0:T(1,128)}', space=vmem, size = 0x12000, scoped, tag = 'internal scratch']
  %s0 = inlined_call_operand.vmem [shape: f32[8,128], index: 0, kind: input, shape index: {}]
  %s1 = inlined_call_operand.hbm [shape: f32[8,128], index: 1, kind: input, shape index: {}]
  %s2 = inlined_call_operand.vmem [shape: f32[8,1], index: 2, kind: input, shape index: {}]
  %s3 = inlined_call_operand.hbm [shape: f32[1,8,128], index: 3, kind: output, shape index: {}]
  %s4 = sld [smem:[#allocation0]]
  $region26: #{tpu_custom_call.1} parent=0
    _
  %s6 = ssub.s32 1, %s4
  %s7 = scalar_select 0, %s6, %s4
  $region1: #{tpu_custom_call.1} parent=0
    #allocation2 [shape = 'u8[4096]{0}', space=vmem, size = 0x1000, scoped, tag = 'input window, operand 1, single buffered']
    #allocation3 [shape = 's32[1]{0}', space=sflag, size = 0x4, scoped, tag = 'scoped memory for tpu_custom_call.1']
    #allocation4 [shape = 's32[1]{0}', space=sflag, size = 0x4, scoped, tag = 'scoped memory for tpu_custom_call.1']
    #allocation5 [shape = 'u8[4096]{0}', space=vmem, size = 0x1000, scoped, tag = 'output window, operand 0, single buffered']
    %8 = vsyncpa [#allocation3], 0
    %9 = vsyncpa [#allocation4], 0
    // Predicated region
    $region2: #{tpu_custom_call.1} parent=1 // pred_check
      _
    $region3: #{tpu_custom_call.1} parent=1 // pred_check_branch
      %11 = sbr.rel (0) target = $region5
    $region4: #{tpu_custom_call.1} parent=1 // pred_region
      _
    $region5: #{tpu_custom_call.1} parent=1 // pred_fallthru
      _
    // Predicated region
    $region6: #{tpu_custom_call.1} parent=1 // pred_check
      _
    $region7: #{tpu_custom_call.1} parent=1 // pred_check_branch
      %13 = sbr.rel (0) target = $region9
    $region8: #{tpu_custom_call.1} parent=1 // pred_region
      %s15 = ssub.s32 128, 128
      %16 = vsyncadd [#allocation3], %s15
      %s18 = sshll.u32 [#allocation2], 4
      %s19 = int_to_ptr.vmem [resolvable:$true] %s18
      %21 = dma.hbm_to_vmem [thread:$0]  %s1, 128, %s19, [#allocation3]
    $region9: #{tpu_custom_call.1} parent=1 // pred_fallthru
      _
    // Predicated region
    $region10: #{tpu_custom_call.1} parent=1 // pred_check
      _
    $region11: #{tpu_custom_call.1} parent=1 // pred_check_branch
      %23 = sbr.rel (0) target = $region13
    $region12: #{tpu_custom_call.1} parent=1 // pred_region
      _
    $region13: #{tpu_custom_call.1} parent=1 // pred_fallthru
      _
    // Predicated region
    $region14: #{tpu_custom_call.1} parent=1 // pred_check
      _
    $region15: #{tpu_custom_call.1} parent=1 // pred_check_branch
      %25 = sbr.rel (0) target = $region17
    $region16: #{tpu_custom_call.1} parent=1 // pred_region
      %26 = dma.done [#allocation3], 128
    $region17: #{tpu_custom_call.1} parent=1 // pred_fallthru
      _
    %v27 = vld [vmem:[%s0] sm:$0xff]
    %v28 = vld [vmem:[#allocation2] sm:$0xff]
    %v29 = vld [vmem:[%s2] sm:$0xff]
    %v30 = vlaneseq
    %v31 = vshrl.u32 %v30, 7
    %s32 = smul.u32 0, 8
    %v33 = vstv %s32
    %v34 = vadd.s32 %v31, %v33
    %vm35 = vcmp.lt.s32.totalorder %v34, 8
    %v36 = vsub.f32 %v27, %v28
    %v37 = vmul.f32 %v36, %v36
    %38 = vadd.xlane.f32.xlu0 %v37
    %v39 = vpop.xlane.xlu0 %38
    %v40 = vsel %vm35, %v39, 0.0
    %vm41 = vcmask 7168
    %v42 = vsel %vm41, %v40, 0.0
    %43 = vadd.xlane.f32.xlu0 %v42
    %v44 = vpop.xlane.xlu0 %43
    %v45 = vrot.slane %v44, 4
    %v46 = vadd.f32 %v44, %v45
    %v47 = vrot.slane %v46, 2
    %v48 = vadd.f32 %v46, %v47
    %v49 = vrot.slane %v48, 1
    %v50 = vadd.f32 %v48, %v49
    %s51 = vtos %v50
    %52 = vmax.xlane.f32.xlu0 %v27
    %v53 = vpop.xlane.xlu0 %52
    %v54 = vsub.f32 %v27, %v53
    %v55 = vmul.f32 %v54, 1.442695
    %v56 = vpow.pop %v55
    %57 = vadd.xlane.f32.xlu0 %v56
    %v58 = vpop.xlane.xlu0 %57
    %v59 = vlog2.pop %v58
    %v60 = vmul.f32 %v59, 0.6931472
    %61 = vadd.xlane.f32.xlu0 %v54
    %v62 = vpop.xlane.xlu0 %61
    %v63 = vmul.f32 %v60, 128.0
    %v64 = vsub.f32 %v62, %v63
    %v65 = vsub.f32 %v29, %v53
    %v66 = vsub.f32 %v65, %v60
    %v67 = vmul.f32 %v66, 0.9
    %v68 = vsub.f32 %v64, %v66
    %v69 = vmul.f32 %v68, 0.0007874016
    %v70 = vadd.f32 %v67, %v69
    %v71 = vsub.f32 0.0, %v70
    %v72 = vsel %vm35, %v71, 0.0
    %v73 = vsel %vm41, %v72, 0.0
    %74 = vadd.xlane.f32.xlu0 %v73
    %v75 = vpop.xlane.xlu0 %74
    %v76 = vrot.slane %v75, 4
    %v77 = vadd.f32 %v75, %v76
    %v78 = vrot.slane %v77, 2
    %v79 = vadd.f32 %v77, %v78
    %v80 = vrot.slane %v79, 1
    %v81 = vadd.f32 %v79, %v80
    %s82 = vtos %v81
    %v83 = vlaneseq
    %v84 = vand.u32 %v83, 127
    %vm85 = vcmp.eq.s32.totalorder %v31, 0
    %vm86 = vcmp.eq.s32.totalorder %v84, 0
    %vm87 = vmand %vm85, %vm86
    %vm88 = vcmp.eq.s32.totalorder %v84, 1
    %vm89 = vmand %vm85, %vm88
    %v90 = vstv %s82
    %v91 = vsel %vm89, %v90, 0.0
    %v92 = vstv %s51
    %v93 = vsel %vm87, %v92, %v91
    %94 = vst [vmem:[#allocation5] sm:$0xff] %v93
    // Predicated region
    $region18: #{tpu_custom_call.1} parent=1 // pred_check
      _
    $region19: #{tpu_custom_call.1} parent=1 // pred_check_branch
      %96 = sbr.rel (0) target = $region21
    $region20: #{tpu_custom_call.1} parent=1 // pred_region
      %s98 = ssub.s32 128, 128
      %99 = vsyncadd [#allocation4], %s98
      %s101 = sshll.u32 [#allocation5], 4
      %s102 = int_to_ptr.vmem [resolvable:$true] %s101
      %104 = dma.vmem_to_hbm [thread:$0]  %s102, 128, %s3, [#allocation4]
    $region21: #{tpu_custom_call.1} parent=1 // pred_fallthru
      _
    // Predicated region
    $region22: #{tpu_custom_call.1} parent=1 // pred_check
      _
    $region23: #{tpu_custom_call.1} parent=1 // pred_check_branch
      %106 = sbr.rel (0) target = $region25
    $region24: #{tpu_custom_call.1} parent=1 // pred_region
      %107 = dma.done [#allocation4], 128
    $region25: #{tpu_custom_call.1} parent=1 // pred_fallthru
      _
    %108 = vsyncpa [#allocation3], 1
    %109 = vsyncpa [#allocation4], 1

</llo_original>
